<compile_context>
chip_gen: v7x
topology: tpu7x:2x2x1
jax: 0.10.0
libtpu: 0.0.40
codegen_flags: <defaults>
</compile_context>

<pallas_src>
import functools

import jax
import jax.numpy as jnp
from jax.experimental import pallas as pl
from jax.experimental.pallas import tpu as pltpu

EPS = 1e-10
LANES = 128
SUB = 32          # sublane multiple keeping both f32 and int8 tiles layout-dense
MAX_ROW_TILE = 512


def _round_up(x, m):
    return ((x + m - 1) // m) * m


def dice_ce_kernel(p_ref, t_ref, out_ref, acc_ce, acc_valid, acc_inter, acc_union,
                   *, num_classes, out_rows):
    """One grid step processes one (batch b, spatial row-tile t) block.

    p_ref:   (C, Rt, 128) f32 softmax probabilities
    t_ref:   (Rt, 128)    int8 class labels (padded pixels hold `num_classes`)
    out_ref: (out_rows, 128) f32 per-batch partial sums (written at the last tile)
    """
    C = num_classes
    t_idx = pl.program_id(1)

    @pl.when(t_idx == 0)
    def _init():
        acc_ce[...] = jnp.zeros_like(acc_ce)
        acc_valid[...] = jnp.zeros_like(acc_valid)
        acc_inter[...] = jnp.zeros_like(acc_inter)
        acc_union[...] = jnp.zeros_like(acc_union)

    p = p_ref[...].astype(jnp.float32)                       # (C, Rt, 128)
    labels = t_ref[...].astype(jnp.int32)                    # (Rt, 128)

    # Fused one-hot over the channel axis (padded pixels match no channel -> all zeros).
    cids = jax.lax.broadcasted_iota(jnp.int32, p.shape, 0)   # (C, Rt, 128)
    onehot = (labels[None, :, :] == cids).astype(jnp.float32)

    inter_terms = p * onehot                                 # (C, Rt, 128)
    p_sel = jnp.sum(inter_terms, axis=0)                     # prob of the true class
    valid = jnp.sum(onehot, axis=0)                          # 1 for real pixels, 0 for pad

    # Hot path: pure VPU adds/mults + a single EUP log per pixel. No per-step XLU reductions.
    acc_ce[...] += valid * jnp.log(p_sel + EPS)
    acc_valid[...] += valid
    acc_inter[...] += inter_terms
    acc_union[...] += p + onehot

    @pl.when(t_idx == pl.num_programs(1) - 1)
    def _finalize():
        # One set of cross-lane reductions per batch element; scalars are scattered into a
        # lane-dense (out_rows, 128) output row block and combined in JAX outside the kernel.
        row_ids = jax.lax.broadcasted_iota(jnp.int32, (out_rows, LANES), 0)
        out = jnp.where(row_ids == 0, jnp.sum(acc_ce[...]), 0.0)
        out = jnp.where(row_ids == 1, jnp.sum(acc_valid[...]), out)
        for c in range(C):
            out = jnp.where(row_ids == 2 + c, jnp.sum(acc_inter[c]), out)
            out = jnp.where(row_ids == 2 + C + c, jnp.sum(acc_union[c]), out)
        out_ref[...] = out


@functools.partial(jax.jit, static_argnames=("alpha",))
def dice_ce_loss(pred_mask, target_mask, alpha=0.5):
    """pred_mask: (B, C, H, W) softmax probs (channel axis = 1), target_mask: (B, H, W) ints."""
    # TODO(synk): the PyTorch simplex() allclose assertions are host-side input sanity checks
    # and are not reproduced in-kernel.
    B, C, H, W = pred_mask.shape
    N = H * W

    # Lane-dense spatial layout: N pixels -> R_pad rows of 128 lanes, tiled by Rt rows.
    R = (N + LANES - 1) // LANES
    if R <= MAX_ROW_TILE:
        Rt = _round_up(max(R, 1), SUB)
        R_pad = Rt
    else:
        Rt = MAX_ROW_TILE
        R_pad = _round_up(R, Rt)
    T = R_pad // Rt
    N_pad = R_pad * LANES

    pred = pred_mask.astype(jnp.float32).reshape(B, C, N)
    tgt = target_mask.astype(jnp.int8).reshape(B, N)
    if N_pad != N:
        # Pad probs with 0 and labels with the invalid class id C so padded pixels
        # contribute nothing to any sum.
        pred = jnp.pad(pred, ((0, 0), (0, 0), (0, N_pad - N)))
        tgt = jnp.pad(tgt, ((0, 0), (0, N_pad - N)), constant_values=C)
    pred = pred.reshape(B, C, R_pad, LANES)
    tgt = tgt.reshape(B, R_pad, LANES)

    ROWS = _round_up(2 + 2 * C, 8)       # [ce_num, mask_sum, inter_0..C-1, union_0..C-1]
    kernel = functools.partial(dice_ce_kernel, num_classes=C, out_rows=ROWS)

    partials = pl.pallas_call(
        kernel,
        out_shape=jax.ShapeDtypeStruct((B, ROWS, LANES), jnp.float32),
        grid_spec=pltpu.PrefetchScalarGridSpec(
            num_scalar_prefetch=0,
            grid=(B, T),
            in_specs=[
                pl.BlockSpec((pl.Squeezed(), C, Rt, LANES), lambda b, t: (b, 0, t, 0)),
                pl.BlockSpec((pl.Squeezed(), Rt, LANES), lambda b, t: (b, t, 0)),
            ],
            out_specs=pl.BlockSpec((pl.Squeezed(), ROWS, LANES), lambda b, t: (b, 0, 0)),
            scratch_shapes=[
                pltpu.VMEM((Rt, LANES), jnp.float32),       # acc_ce   (sum of log p_true)
                pltpu.VMEM((Rt, LANES), jnp.float32),       # acc_valid (one-hot mass)
                pltpu.VMEM((C, Rt, LANES), jnp.float32),    # acc_inter (per-channel p*t)
                pltpu.VMEM((C, Rt, LANES), jnp.float32),    # acc_union (per-channel p+t)
            ],
        ),
        compiler_params=pltpu.CompilerParams(
            dimension_semantics=("parallel", "arbitrary")),
    )(pred, tgt)

    # Final scalar combine in plain JAX (matches the PyTorch module exactly).
    vals = partials[:, :, 0]                                  # (B, ROWS)
    ce_num = jnp.sum(vals[:, 0])
    mask_sum = jnp.sum(vals[:, 1])
    ce_loss = -ce_num / (mask_sum + EPS)
    inter = vals[:, 2:2 + C]                                  # (B, C)
    union = vals[:, 2 + C:2 + 2 * C]                          # (B, C)
    dice_loss = jnp.mean(1.0 - (2.0 * inter + EPS) / (union + EPS))
    return alpha * ce_loss + (1.0 - alpha) * dice_loss


def reference_loss(pred, labels, alpha=0.5):
    """Pure-JAX reference mirroring the PyTorch module (idc=[0,1])."""
    B, C, H, W = pred.shape
    onehot = jax.nn.one_hot(labels, C, axis=1, dtype=jnp.float32)   # (B, C, H, W)
    log_p = jnp.log(pred.astype(jnp.float32) + EPS)
    ce = -jnp.sum(onehot * log_p) / (jnp.sum(onehot) + EPS)
    inter = jnp.einsum("bcxy,bcxy->bc", pred, onehot)
    union = jnp.sum(pred, axis=(2, 3)) + jnp.sum(onehot, axis=(2, 3))
    dice = jnp.mean(1.0 - (2.0 * inter + EPS) / (union + EPS))
    return alpha * ce + (1.0 - alpha) * dice


if __name__ == "__main__":
    key = jax.random.PRNGKey(0)
    k1, k2 = jax.random.split(key)

    B, C, H, W = 2, 2, 16, 16
    logits = jax.random.normal(k1, (B, C, H, W), dtype=jnp.float32)
    pred_mask = jax.nn.softmax(logits, axis=1)                       # simplex along channels
    target_mask = jax.random.randint(k2, (B, H, W), 0, C, dtype=jnp.int32)

    loss = dice_ce_loss(pred_mask, target_mask, alpha=0.5)
    loss = jax.block_until_ready(loss)

    ref = reference_loss(pred_mask, target_mask, alpha=0.5)
    assert jnp.allclose(loss, ref, atol=1e-5, rtol=1e-5), (float(loss), float(ref))
    print("KERNEL_OK")
</pallas_src>

<mosaic_0001>
module attributes {stable_mosaic.version = 11 : i64} {
  func.func @dice_ce_kernel(%arg0: i32, %arg1: i32, %arg2: memref<1x2x32x128xf32, #tpu.memory_space<vmem>>, %arg3: memref<1x32x128xi8, #tpu.memory_space<vmem>>, %arg4: memref<1x8x128xf32, #tpu.memory_space<vmem>>, %arg5: memref<32x128xf32, #tpu.memory_space<vmem>>, %arg6: memref<32x128xf32, #tpu.memory_space<vmem>>, %arg7: memref<2x32x128xf32, #tpu.memory_space<vmem>>, %arg8: memref<2x32x128xf32, #tpu.memory_space<vmem>>) attributes {dimension_semantics = [#tpu.dimension_semantics<parallel>, #tpu.dimension_semantics<arbitrary>], iteration_bounds = array<i64: 2, 1>, scalar_prefetch = 0 : i64, scratch_operands = 4 : i64, tpu.core_type = #tpu.core_type<tc>, window_params = [{transform_indices = @transform_0, window_bounds = array<i64: 1, 2, 32, 128>}, {transform_indices = @transform_1, window_bounds = array<i64: 1, 32, 128>}, {transform_indices = @transform_2, window_bounds = array<i64: 1, 8, 128>}]} {
    %c0_i32 = arith.constant 0 : i32
    %0 = arith.cmpi eq, %arg1, %c0_i32 : i32
    %1 = arith.extui %0 : i1 to i32
    %c0_i32_0 = arith.constant 0 : i32
    %2 = arith.cmpi ne, %1, %c0_i32_0 : i32
    scf.if %2 {
      %cst_31 = arith.constant 0.000000e+00 : f32
      %37 = vector.broadcast %cst_31 : f32 to vector<32x128xf32>
      %c0_32 = arith.constant 0 : index
      %c0_33 = arith.constant 0 : index
      %38 = vector.load %arg5[%c0_32, %c0_33] : memref<32x128xf32, #tpu.memory_space<vmem>>, vector<32x128xf32>
      tpu.vector_store %arg5[%c0_32, %c0_33], %37 {strides = array<i32>} : memref<32x128xf32, #tpu.memory_space<vmem>>, vector<32x128xf32>,
      %cst_34 = arith.constant 0.000000e+00 : f32
      %39 = vector.broadcast %cst_34 : f32 to vector<32x128xf32>
      %c0_35 = arith.constant 0 : index
      %c0_36 = arith.constant 0 : index
      %40 = vector.load %arg6[%c0_35, %c0_36] : memref<32x128xf32, #tpu.memory_space<vmem>>, vector<32x128xf32>
      tpu.vector_store %arg6[%c0_35, %c0_36], %39 {strides = array<i32>} : memref<32x128xf32, #tpu.memory_space<vmem>>, vector<32x128xf32>,
      %cst_37 = arith.constant 0.000000e+00 : f32
      %41 = vector.broadcast %cst_37 : f32 to vector<2x32x128xf32>
      %c0_38 = arith.constant 0 : index
      %c0_39 = arith.constant 0 : index
      %c0_40 = arith.constant 0 : index
      %42 = vector.load %arg7[%c0_38, %c0_39, %c0_40] : memref<2x32x128xf32, #tpu.memory_space<vmem>>, vector<2x32x128xf32>
      tpu.vector_store %arg7[%c0_38, %c0_39, %c0_40], %41 {strides = array<i32>} : memref<2x32x128xf32, #tpu.memory_space<vmem>>, vector<2x32x128xf32>,
      %cst_41 = arith.constant 0.000000e+00 : f32
      %43 = vector.broadcast %cst_41 : f32 to vector<2x32x128xf32>
      %c0_42 = arith.constant 0 : index
      %c0_43 = arith.constant 0 : index
      %c0_44 = arith.constant 0 : index
      %44 = vector.load %arg8[%c0_42, %c0_43, %c0_44] : memref<2x32x128xf32, #tpu.memory_space<vmem>>, vector<2x32x128xf32>
      tpu.vector_store %arg8[%c0_42, %c0_43, %c0_44], %43 {strides = array<i32>} : memref<2x32x128xf32, #tpu.memory_space<vmem>>, vector<2x32x128xf32>,
    } else {
    }
    %c0 = arith.constant 0 : index
    %c0_1 = arith.constant 0 : index
    %c0_2 = arith.constant 0 : index
    %c0_3 = arith.constant 0 : index
    %3 = vector.load %arg2[%c0, %c0_1, %c0_2, %c0_3] : memref<1x2x32x128xf32, #tpu.memory_space<vmem>>, vector<1x2x32x128xf32>
    %4 = vector.shape_cast %3 : vector<1x2x32x128xf32> to vector<2x32x128xf32>
    %c0_4 = arith.constant 0 : index
    %c0_5 = arith.constant 0 : index
    %c0_6 = arith.constant 0 : index
    %5 = vector.load %arg3[%c0_4, %c0_5, %c0_6] : memref<1x32x128xi8, #tpu.memory_space<vmem>>, vector<1x32x128xi8>
    %6 = vector.shape_cast %5 : vector<1x32x128xi8> to vector<32x128xi8>
    %7 = arith.extsi %6 : vector<32x128xi8> to vector<32x128xi32>
    %8 = tpu.iota {dimensions = array<i32: 0>} : vector<2x32x128xi32>
    %9 = vector.shape_cast %7 : vector<32x128xi32> to vector<1x32x128xi32>
    %10 = vector.broadcast %9 : vector<1x32x128xi32> to vector<2x32x128xi32>
    %11 = arith.cmpi eq, %10, %8 : vector<2x32x128xi32>
    %12 = arith.extui %11 : vector<2x32x128xi1> to vector<2x32x128xi32>
    %13 = arith.sitofp %12 : vector<2x32x128xi32> to vector<2x32x128xf32>
    %14 = arith.mulf %4, %13 : vector<2x32x128xf32>
    %cst = arith.constant dense<0.000000e+00> : vector<32x128xf32>
    %15 = vector.multi_reduction <add>, %14, %cst [0] : vector<2x32x128xf32> to vector<32x128xf32>
    %cst_7 = arith.constant dense<0.000000e+00> : vector<32x128xf32>
    %16 = vector.multi_reduction <add>, %13, %cst_7 [0] : vector<2x32x128xf32> to vector<32x128xf32>
    %c0_8 = arith.constant 0 : index
    %c0_9 = arith.constant 0 : index
    %17 = vector.load %arg5[%c0_8, %c0_9] : memref<32x128xf32, #tpu.memory_space<vmem>>, vector<32x128xf32>
    %cst_10 = arith.constant 1.000000e-10 : f32
    %18 = vector.broadcast %cst_10 : f32 to vector<32x128xf32>
    %19 = arith.addf %15, %18 : vector<32x128xf32>
    %20 = math.log %19 : vector<32x128xf32>
    %21 = arith.mulf %16, %20 : vector<32x128xf32>
    %22 = arith.addf %17, %21 : vector<32x128xf32>
    %c0_11 = arith.constant 0 : index
    %c0_12 = arith.constant 0 : index
    %23 = vector.load %arg5[%c0_11, %c0_12] : memref<32x128xf32, #tpu.memory_space<vmem>>, vector<32x128xf32>
    tpu.vector_store %arg5[%c0_11, %c0_12], %22 {strides = array<i32>} : memref<32x128xf32, #tpu.memory_space<vmem>>, vector<32x128xf32>,
    %c0_13 = arith.constant 0 : index
    %c0_14 = arith.constant 0 : index
    %24 = vector.load %arg6[%c0_13, %c0_14] : memref<32x128xf32, #tpu.memory_space<vmem>>, vector<32x128xf32>
    %25 = arith.addf %24, %16 : vector<32x128xf32>
    %c0_15 = arith.constant 0 : index
    %c0_16 = arith.constant 0 : index
    %26 = vector.load %arg6[%c0_15, %c0_16] : memref<32x128xf32, #tpu.memory_space<vmem>>, vector<32x128xf32>
    tpu.vector_store %arg6[%c0_15, %c0_16], %25 {strides = array<i32>} : memref<32x128xf32, #tpu.memory_space<vmem>>, vector<32x128xf32>,
    %c0_17 = arith.constant 0 : index
    %c0_18 = arith.constant 0 : index
    %c0_19 = arith.constant 0 : index
    %27 = vector.load %arg7[%c0_17, %c0_18, %c0_19] : memref<2x32x128xf32, #tpu.memory_space<vmem>>, vector<2x32x128xf32>
    %28 = arith.addf %27, %14 : vector<2x32x128xf32>
    %c0_20 = arith.constant 0 : index
    %c0_21 = arith.constant 0 : index
    %c0_22 = arith.constant 0 : index
    %29 = vector.load %arg7[%c0_20, %c0_21, %c0_22] : memref<2x32x128xf32, #tpu.memory_space<vmem>>, vector<2x32x128xf32>
    tpu.vector_store %arg7[%c0_20, %c0_21, %c0_22], %28 {strides = array<i32>} : memref<2x32x128xf32, #tpu.memory_space<vmem>>, vector<2x32x128xf32>,
    %c0_23 = arith.constant 0 : index
    %c0_24 = arith.constant 0 : index
    %c0_25 = arith.constant 0 : index
    %30 = vector.load %arg8[%c0_23, %c0_24, %c0_25] : memref<2x32x128xf32, #tpu.memory_space<vmem>>, vector<2x32x128xf32>
    %31 = arith.addf %4, %13 : vector<2x32x128xf32>
    %32 = arith.addf %30, %31 : vector<2x32x128xf32>
    %c0_26 = arith.constant 0 : index
    %c0_27 = arith.constant 0 : index
    %c0_28 = arith.constant 0 : index
    %33 = vector.load %arg8[%c0_26, %c0_27, %c0_28] : memref<2x32x128xf32, #tpu.memory_space<vmem>>, vector<2x32x128xf32>
    tpu.vector_store %arg8[%c0_26, %c0_27, %c0_28], %32 {strides = array<i32>} : memref<2x32x128xf32, #tpu.memory_space<vmem>>, vector<2x32x128xf32>,
    %c0_i32_29 = arith.constant 0 : i32
    %34 = arith.cmpi eq, %arg1, %c0_i32_29 : i32
    %35 = arith.extui %34 : i1 to i32
    %c0_i32_30 = arith.constant 0 : i32
    %36 = arith.cmpi ne, %35, %c0_i32_30 : i32
    scf.if %36 {
      %37 = tpu.iota {dimensions = array<i32: 0>} : vector<8x128xi32>
      %c0_i32_31 = arith.constant 0 : i32
      %38 = vector.broadcast %c0_i32_31 : i32 to vector<8x128xi32>
      %39 = arith.cmpi eq, %37, %38 : vector<8x128xi32>
      %c0_32 = arith.constant 0 : index
      %c0_33 = arith.constant 0 : index
      %40 = vector.load %arg5[%c0_32, %c0_33] : memref<32x128xf32, #tpu.memory_space<vmem>>, vector<32x128xf32>
      %41 = vector.shape_cast %40 : vector<32x128xf32> to vector<1x32x128xf32>
      %cst_34 = arith.constant dense<0.000000e+00> : vector<1xf32>
      %42 = vector.multi_reduction <add>, %41, %cst_34 [1, 2] : vector<1x32x128xf32> to vector<1xf32>
      %43 = vector.shape_cast %42 : vector<1xf32> to vector<1x1x1xf32>
      %44 = vector.extract %43[0, 0, 0] : f32 from vector<1x1x1xf32>
      %cst_35 = arith.constant 0.000000e+00 : f32
      %45 = vector.broadcast %44 : f32 to vector<8x128xf32>
      %46 = vector.broadcast %cst_35 : f32 to vector<8x128xf32>
      %47 = arith.select %39, %45, %46 : vector<8x128xi1>, vector<8x128xf32>
      %c1_i32 = arith.constant 1 : i32
      %48 = vector.broadcast %c1_i32 : i32 to vector<8x128xi32>
      %49 = arith.cmpi eq, %37, %48 : vector<8x128xi32>
      %c0_36 = arith.constant 0 : index
      %c0_37 = arith.constant 0 : index
      %50 = vector.load %arg6[%c0_36, %c0_37] : memref<32x128xf32, #tpu.memory_space<vmem>>, vector<32x128xf32>
      %51 = vector.shape_cast %50 : vector<32x128xf32> to vector<1x32x128xf32>
      %cst_38 = arith.constant dense<0.000000e+00> : vector<1xf32>
      %52 = vector.multi_reduction <add>, %51, %cst_38 [1, 2] : vector<1x32x128xf32> to vector<1xf32>
      %53 = vector.shape_cast %52 : vector<1xf32> to vector<1x1x1xf32>
      %54 = vector.extract %53[0, 0, 0] : f32 from vector<1x1x1xf32>
      %55 = vector.broadcast %54 : f32 to vector<8x128xf32>
      %56 = arith.select %49, %55, %47 : vector<8x128xi1>, vector<8x128xf32>
      %c2_i32 = arith.constant 2 : i32
      %57 = vector.broadcast %c2_i32 : i32 to vector<8x128xi32>
      %58 = arith.cmpi eq, %37, %57 : vector<8x128xi32>
      %c0_39 = arith.constant 0 : index
      %c0_40 = arith.constant 0 : index
      %c0_41 = arith.constant 0 : index
      %59 = vector.load %arg7[%c0_39, %c0_40, %c0_41] : memref<2x32x128xf32, #tpu.memory_space<vmem>>, vector<1x32x128xf32>
      %60 = vector.shape_cast %59 : vector<1x32x128xf32> to vector<32x128xf32>
      %61 = vector.shape_cast %60 : vector<32x128xf32> to vector<1x32x128xf32>
      %cst_42 = arith.constant dense<0.000000e+00> : vector<1xf32>
      %62 = vector.multi_reduction <add>, %61, %cst_42 [1, 2] : vector<1x32x128xf32> to vector<1xf32>
      %63 = vector.shape_cast %62 : vector<1xf32> to vector<1x1x1xf32>
      %64 = vector.extract %63[0, 0, 0] : f32 from vector<1x1x1xf32>
      %65 = vector.broadcast %64 : f32 to vector<8x128xf32>
      %66 = arith.select %58, %65, %56 : vector<8x128xi1>, vector<8x128xf32>
      %c4_i32 = arith.constant 4 : i32
      %67 = vector.broadcast %c4_i32 : i32 to vector<8x128xi32>
      %68 = arith.cmpi eq, %37, %67 : vector<8x128xi32>
      %c0_43 = arith.constant 0 : index
      %c0_44 = arith.constant 0 : index
      %c0_45 = arith.constant 0 : index
      %69 = vector.load %arg8[%c0_43, %c0_44, %c0_45] : memref<2x32x128xf32, #tpu.memory_space<vmem>>, vector<1x32x128xf32>
      %70 = vector.shape_cast %69 : vector<1x32x128xf32> to vector<32x128xf32>
      %71 = vector.shape_cast %70 : vector<32x128xf32> to vector<1x32x128xf32>
      %cst_46 = arith.constant dense<0.000000e+00> : vector<1xf32>
      %72 = vector.multi_reduction <add>, %71, %cst_46 [1, 2] : vector<1x32x128xf32> to vector<1xf32>
      %73 = vector.shape_cast %72 : vector<1xf32> to vector<1x1x1xf32>
      %74 = vector.extract %73[0, 0, 0] : f32 from vector<1x1x1xf32>
      %75 = vector.broadcast %74 : f32 to vector<8x128xf32>
      %76 = arith.select %68, %75, %66 : vector<8x128xi1>, vector<8x128xf32>
      %c3_i32 = arith.constant 3 : i32
      %77 = vector.broadcast %c3_i32 : i32 to vector<8x128xi32>
      %78 = arith.cmpi eq, %37, %77 : vector<8x128xi32>
      %c1 = arith.constant 1 : index
      %c0_47 = arith.constant 0 : index
      %c0_48 = arith.constant 0 : index
      %79 = vector.load %arg7[%c1, %c0_47, %c0_48] : memref<2x32x128xf32, #tpu.memory_space<vmem>>, vector<1x32x128xf32>
      %80 = vector.shape_cast %79 : vector<1x32x128xf32> to vector<32x128xf32>
      %81 = vector.shape_cast %80 : vector<32x128xf32> to vector<1x32x128xf32>
      %cst_49 = arith.constant dense<0.000000e+00> : vector<1xf32>
      %82 = vector.multi_reduction <add>, %81, %cst_49 [1, 2] : vector<1x32x128xf32> to vector<1xf32>
      %83 = vector.shape_cast %82 : vector<1xf32> to vector<1x1x1xf32>
      %84 = vector.extract %83[0, 0, 0] : f32 from vector<1x1x1xf32>
      %85 = vector.broadcast %84 : f32 to vector<8x128xf32>
      %86 = arith.select %78, %85, %76 : vector<8x128xi1>, vector<8x128xf32>
      %c5_i32 = arith.constant 5 : i32
      %87 = vector.broadcast %c5_i32 : i32 to vector<8x128xi32>
      %88 = arith.cmpi eq, %37, %87 : vector<8x128xi32>
      %c1_50 = arith.constant 1 : index
      %c0_51 = arith.constant 0 : index
      %c0_52 = arith.constant 0 : index
      %89 = vector.load %arg8[%c1_50, %c0_51, %c0_52] : memref<2x32x128xf32, #tpu.memory_space<vmem>>, vector<1x32x128xf32>
      %90 = vector.shape_cast %89 : vector<1x32x128xf32> to vector<32x128xf32>
      %91 = vector.shape_cast %90 : vector<32x128xf32> to vector<1x32x128xf32>
      %cst_53 = arith.constant dense<0.000000e+00> : vector<1xf32>
      %92 = vector.multi_reduction <add>, %91, %cst_53 [1, 2] : vector<1x32x128xf32> to vector<1xf32>
      %93 = vector.shape_cast %92 : vector<1xf32> to vector<1x1x1xf32>
      %94 = vector.extract %93[0, 0, 0] : f32 from vector<1x1x1xf32>
      %95 = vector.broadcast %94 : f32 to vector<8x128xf32>
      %96 = arith.select %88, %95, %86 : vector<8x128xi1>, vector<8x128xf32>
      %c0_54 = arith.constant 0 : index
      %c0_55 = arith.constant 0 : index
      %c0_56 = arith.constant 0 : index
      %97 = vector.load %arg4[%c0_54, %c0_55, %c0_56] : memref<1x8x128xf32, #tpu.memory_space<vmem>>, vector<1x8x128xf32>
      %98 = vector.shape_cast %97 : vector<1x8x128xf32> to vector<8x128xf32>
      %99 = vector.shape_cast %96 : vector<8x128xf32> to vector<1x8x128xf32>
      tpu.vector_store %arg4[%c0_54, %c0_55, %c0_56], %99 {strides = array<i32>} : memref<1x8x128xf32, #tpu.memory_space<vmem>>, vector<1x8x128xf32>,
    } else {
    }
    return
  }
  func.func @transform_0(%arg0: i32, %arg1: i32) -> (i32, i32, i32, i32) {
    %c0_i32 = arith.constant 0 : i32
    %c0_i32_0 = arith.constant 0 : i32
    %c0_i32_1 = arith.constant 0 : i32
    return %arg0, %c0_i32, %arg1, %c0_i32_0 : i32, i32, i32, i32
  }
  func.func @transform_1(%arg0: i32, %arg1: i32) -> (i32, i32, i32) {
    %c0_i32 = arith.constant 0 : i32
    %c0_i32_0 = arith.constant 0 : i32
    return %arg0, %arg1, %c0_i32 : i32, i32, i32
  }
  func.func @transform_2(%arg0: i32, %arg1: i32) -> (i32, i32, i32) {
    %c0_i32 = arith.constant 0 : i32
    %c0_i32_0 = arith.constant 0 : i32
    %c0_i32_1 = arith.constant 0 : i32
    return %arg0, %c0_i32, %c0_i32_0 : i32, i32, i32
  }
}

</mosaic_0001>

<llo_original>
// kernel: dice_ce_loss.1
$region0: #{dice_ce_loss.1}
  #allocation0 [shape = 'u32[]', space=smem, size = 0x4, offset = 0x4, fixed_abs, tag = 'smem constant byte address 0x4 - core index']
  #allocation1 [shape = 'u32[144,128]{1,0:T(1,128)}', space=vmem, size = 0x12000, scoped, tag = 'internal scratch']
  #allocation2 [shape = 'f32[32,128]{1,0:T(8,128)}', space=vmem, size = 0x4000, scoped, tag = 'scratch operand']
  #allocation3 [shape = 'f32[32,128]{1,0:T(8,128)}', space=vmem, size = 0x4000, scoped, tag = 'scratch operand']
  #allocation4 [shape = 'f32[2,32,128]{2,1,0:T(8,128)}', space=vmem, size = 0x8000, scoped, tag = 'scratch operand']
  #allocation5 [shape = 'f32[2,32,128]{2,1,0:T(8,128)}', space=vmem, size = 0x8000, scoped, tag = 'scratch operand']
  %s0 = inlined_call_operand.vmem [shape: f32[2,2,32,128], index: 0, kind: input, shape index: {}]
  %s1 = inlined_call_operand.vmem [shape: s8[2,32,128], index: 1, kind: input, shape index: {}]
  %s2 = inlined_call_operand.vmem [shape: f32[2,8,128], index: 2, kind: output, shape index: {}]
  %s3 = sld [smem:[#allocation0]]
  $region49: #{dice_ce_loss.1} parent=0
    _
  %s5 = ssub.s32 1, %s3
  %s6 = scalar_select 0, %s5, %s3
  loop: start=0, step=1, limit=4
  $region2: #{dice_ce_loss.1} parent=0 // loop_pre_header
    _
  $region3: #{dice_ce_loss.1} parent=0 // loop_header
    %s8 = sphi 0, %s12
    %p9 = scmp.ge.s32.totalorder %s8, 4
    %s15 = sphi 0, %s27
    %s16 = sphi 0, %s23
    %s17 = sphi 0, %s15
    %s18 = sphi 0, %s16
    %s19 = sphi 0, %s17
    %s20 = sphi 0, %s18
    %s32 = sphi 0, %s34
    %s35 = sphi 0, %s32
    %s36 = sphi 0, %s35
    %s52 = sphi 0, %s36
    %s60 = sphi 0, %s62
    %s63 = sphi 0, %s60
    %s64 = sphi 0, %s63
    %s80 = sphi 0, %s64
    %s86 = sphi 0, %s88
    %s89 = sphi 0, %s86
    %s90 = sphi 0, %s89
    %s106 = sphi 0, %s90
  $region4: #{dice_ce_loss.1} parent=0 // loop_header_branch
    %11 = sbr.rel (%p9) target = $region8
  $region5: #{dice_ce_loss.1} parent=0 // loop_body
    %s13 = ssub.s32 %s8, 1
    %s14 = ssub.s32 %s8, 2
    %s21 = sadd.s32 1, %s16
    %p22 = scmp.ge.s32.totalorder %s21, 1
    %s23 = scalar_select %p22, 0, %s21
    %s24 = sadd.s32 1, %s15
    %s25 = scalar_select %p22, %s24, %s15
    %p26 = scmp.ge.s32.totalorder %s25, 2
    %s27 = scalar_select %p26, 0, %s25
    %s28 = ssub.s32 %s15, %s27
    %s29 = ssub.s32 %s16, %s23
    %s30 = sor.u32 %s28, %s29
    %p31 = scmp.eq.s32.totalorder %s30, 0
    %s33 = sadd.s32 %s32, 1
    %s34 = scalar_select %p31, %s32, %s33
    %p37 = pneg %p31
    %p38 = scmp.eq.s32.totalorder %s8, 1
    %p39 = por %p37, %p38
    %p40 = scmp.ne.s32.totalorder %s32, %s35
    %p41 = scmp.eq.s32.totalorder %s8, 0
    %p42 = por %p40, %p41
    %p43 = scmp.ne.s32.totalorder %s32, %s35
    %p44 = scmp.eq.s32.totalorder %s13, 1
    %p45 = por %p43, %p44
    %p46 = scmp.ne.s32.totalorder %s35, %s36
    %p47 = scmp.eq.s32.totalorder %s13, 0
    %p48 = por %p46, %p47
    %p49 = scmp.ne.s32.totalorder %s35, %s36
    %p50 = scmp.eq.s32.totalorder %s14, 1
    %p51 = por %p49, %p50
    %p53 = scmp.ne.s32.totalorder %s36, %s52
    %p54 = scmp.eq.s32.totalorder %s14, 0
    %p55 = por %p53, %p54
    %s56 = ssub.s32 %s15, %s27
    %s57 = ssub.s32 %s16, %s23
    %s58 = sor.u32 %s56, %s57
    %p59 = scmp.eq.s32.totalorder %s58, 0
    %s61 = sadd.s32 %s60, 1
    %s62 = scalar_select %p59, %s60, %s61
    %p65 = pneg %p59
    %p66 = scmp.eq.s32.totalorder %s8, 1
    %p67 = por %p65, %p66
    %p68 = scmp.ne.s32.totalorder %s60, %s63
    %p69 = scmp.eq.s32.totalorder %s8, 0
    %p70 = por %p68, %p69
    %p71 = scmp.ne.s32.totalorder %s60, %s63
    %p72 = scmp.eq.s32.totalorder %s13, 1
    %p73 = por %p71, %p72
    %p74 = scmp.ne.s32.totalorder %s63, %s64
    %p75 = scmp.eq.s32.totalorder %s13, 0
    %p76 = por %p74, %p75
    %p77 = scmp.ne.s32.totalorder %s63, %s64
    %p78 = scmp.eq.s32.totalorder %s14, 1
    %p79 = por %p77, %p78
    %p81 = scmp.ne.s32.totalorder %s64, %s80
    %p82 = scmp.eq.s32.totalorder %s14, 0
    %p83 = por %p81, %p82
    %s84 = ssub.s32 %s15, %s27
    %p85 = scmp.eq.s32.totalorder %s84, 0
    %s87 = sadd.s32 %s86, 1
    %s88 = scalar_select %p85, %s86, %s87
    %p91 = pneg %p85
    %p92 = scmp.eq.s32.totalorder %s8, 1
    %p93 = por %p91, %p92
    %p94 = scmp.ne.s32.totalorder %s86, %s89
    %p95 = scmp.eq.s32.totalorder %s8, 0
    %p96 = por %p94, %p95
    %p97 = scmp.ne.s32.totalorder %s86, %s89
    %p98 = scmp.eq.s32.totalorder %s13, 1
    %p99 = por %p97, %p98
    %p100 = scmp.ne.s32.totalorder %s89, %s90
    %p101 = scmp.eq.s32.totalorder %s13, 0
    %p102 = por %p100, %p101
    %p103 = scmp.ne.s32.totalorder %s89, %s90
    %p104 = scmp.eq.s32.totalorder %s14, 1
    %p105 = por %p103, %p104
    %p107 = scmp.ne.s32.totalorder %s90, %s106
    %p108 = scmp.eq.s32.totalorder %s14, 0
    %p109 = por %p107, %p108
    %p110 = scmp.le.s32.totalorder 1, %s8
    %p111 = scmp.lt.s32.totalorder %s8, 3
    %p112 = pnand %p110, %p111
    %p113 = pneg %p112
    // Predicated region
    $region9: #{dice_ce_loss.1} parent=5 // pred_check
      _
    $region10: #{dice_ce_loss.1} parent=5 // pred_check_branch
      %115 = sbr.rel (%p112) target = $region12
    $region11: #{dice_ce_loss.1} parent=5 // pred_region
      %s116 = ssub.s32 %s8, 1
    $region12: #{dice_ce_loss.1} parent=5 // pred_fallthru
      _
    %p117 = scmp.lt.s32.totalorder %s8, 2
    // Predicated region
    $region13: #{dice_ce_loss.1} parent=5 // pred_check
      %p118 = pneg %p117
    $region14: #{dice_ce_loss.1} parent=5 // pred_check_branch
      %120 = sbr.rel (%p118) target = $region16
    $region15: #{dice_ce_loss.1} parent=5 // pred_region
      // Predicated region
      $region17: #{dice_ce_loss.1} parent=15 // pred_check
        %p121 = pneg %p42
      $region18: #{dice_ce_loss.1} parent=15 // pred_check_branch
        %123 = sbr.rel (%p121) target = $region20
      $region19: #{dice_ce_loss.1} parent=15 // pred_region
        %s124 = smul.u32 4, %s16
        %p125 = scmp.lt.s32.totalorder %s15, 1
        %s126 = scalar_select %p125, %s15, 1
        %p127 = scmp.lt.s32.totalorder %s124, 3
        %s128 = scalar_select %p127, %s124, 3
        %s129 = smul.addr %s126, 8
        %s130 = sadd.s32 %s128, %s129
        %s131 = smul.addr %s130, 8
        %s132 = scalar_lea.vmem %s0, %s131
        %s133 = smul.u32 4, %s16
      $region20: #{dice_ce_loss.1} parent=15 // pred_fallthru
        _
      // Predicated region
      $region21: #{dice_ce_loss.1} parent=15 // pred_check
        %p134 = pneg %p70
      $region22: #{dice_ce_loss.1} parent=15 // pred_check_branch
        %136 = sbr.rel (%p134) target = $region24
      $region23: #{dice_ce_loss.1} parent=15 // pred_region
        %p137 = scmp.lt.s32.totalorder %s15, 1
        %s138 = scalar_select %p137, %s15, 1
        %p139 = scmp.lt.s32.totalorder %s16, 0
        %s140 = scalar_select %p139, %s16, 0
        %s141 = sadd.s32 %s140, %s138
        %s142 = smul.addr %s141, 8
        %s143 = scalar_lea.vmem %s1, %s142
      $region24: #{dice_ce_loss.1} parent=15 // pred_fallthru
        _
    $region16: #{dice_ce_loss.1} parent=5 // pred_fallthru
      _
    %p144 = scmp.le.s32.totalorder 1, %s8
    %p145 = scmp.lt.s32.totalorder %s8, 3
    %p146 = pnand %p144, %p145
    %p147 = pneg %p146
    // Predicated region
    $region25: #{dice_ce_loss.1} parent=5 // pred_check
      _
    $region26: #{dice_ce_loss.1} parent=5 // pred_check_branch
      %149 = sbr.rel (%p146) target = $region28
    $region27: #{dice_ce_loss.1} parent=5 // pred_region
      %s150 = ssub.s32 %s8, 1
      %s151 = smul.u32 4, %s18
      %p152 = scmp.lt.s32.totalorder %s17, 1
      %s153 = scalar_select %p152, %s17, 1
      %p154 = scmp.lt.s32.totalorder %s151, 3
      %s155 = scalar_select %p154, %s151, 3
      %s156 = smul.addr %s153, 8
      %s157 = sadd.s32 %s155, %s156
      %s158 = smul.addr %s157, 8
      %s159 = scalar_lea.vmem %s0, %s158
      %p160 = pneg %p48
      %p161 = pneg %p45
      %p162 = scmp.lt.s32.totalorder %s17, 1
      %s163 = scalar_select %p162, %s17, 1
      %p164 = scmp.lt.s32.totalorder %s18, 0
      %s165 = scalar_select %p164, %s18, 0
      %s166 = sadd.s32 %s165, %s163
      %s167 = smul.addr %s166, 8
      %s168 = scalar_lea.vmem %s1, %s167
      %p169 = pneg %p76
      %p170 = pneg %p73
      %p171 = pneg %p102
      %p172 = pneg %p99
      %p173 = scmp.lt.s32.totalorder %s17, 1
      %s174 = scalar_select %p173, %s17, 1
      %s175 = smul.addr %s174, 8
      %s176 = scalar_lea.vmem %s2, %s175
      %s177 = smul.u32 4, %s18
      %p178 = scmp.lt.s32.totalorder %s17, 1
      %s179 = scalar_select %p178, %s17, 1
      %p180 = scmp.lt.s32.totalorder %s177, 3
      %s181 = scalar_select %p180, %s177, 3
      %s182 = smul.addr %s179, 8
      %s183 = sadd.s32 %s181, %s182
      %s184 = smul.addr %s183, 8
      %s185 = scalar_lea.vmem %s0, %s184
      %s186 = smul.u32 4, %s18
      %p187 = scmp.lt.s32.totalorder %s17, 1
      %s188 = scalar_select %p187, %s17, 1
      %p189 = scmp.lt.s32.totalorder %s18, 0
      %s190 = scalar_select %p189, %s18, 0
      %s191 = sadd.s32 %s190, %s188
      %s192 = smul.addr %s191, 8
      %s193 = scalar_lea.vmem %s1, %s192
      %p194 = scmp.lt.s32.totalorder %s17, 1
      %s195 = scalar_select %p194, %s17, 1
      %s196 = smul.addr %s195, 8
      %s197 = scalar_lea.vmem %s2, %s196
      %p198 = scmp.eq.s32.totalorder %s18, 0
      // Predicated region
      $region29: #{dice_ce_loss.1} parent=27 // pred_check
        %p199 = pneg %p198
      $region30: #{dice_ce_loss.1} parent=27 // pred_check_branch
        %201 = sbr.rel (%p199) target = $region32
      $region31: #{dice_ce_loss.1} parent=27 // pred_region
        %202 = vst [vmem:[#allocation2] sm:$0xff] 0.0
        %203 = vst [vmem:[#allocation2 + $0x8] sm:$0xff] 0.0
        %204 = vst [vmem:[#allocation2 + $0x10] sm:$0xff] 0.0
        %205 = vst [vmem:[#allocation2 + $0x18] sm:$0xff] 0.0
        %206 = vst [vmem:[#allocation3] sm:$0xff] 0.0
        %207 = vst [vmem:[#allocation3 + $0x8] sm:$0xff] 0.0
        %208 = vst [vmem:[#allocation3 + $0x10] sm:$0xff] 0.0
        %209 = vst [vmem:[#allocation3 + $0x18] sm:$0xff] 0.0
        %210 = vst [vmem:[#allocation4] sm:$0xff] 0.0
        %211 = vst [vmem:[#allocation4 + $0x8] sm:$0xff] 0.0
        %212 = vst [vmem:[#allocation4 + $0x10] sm:$0xff] 0.0
        %213 = vst [vmem:[#allocation4 + $0x18] sm:$0xff] 0.0
        %214 = vst [vmem:[#allocation4 + $0x20] sm:$0xff] 0.0
        %215 = vst [vmem:[#allocation4 + $0x28] sm:$0xff] 0.0
        %216 = vst [vmem:[#allocation4 + $0x30] sm:$0xff] 0.0
        %217 = vst [vmem:[#allocation4 + $0x38] sm:$0xff] 0.0
        %218 = vst [vmem:[#allocation5] sm:$0xff] 0.0
        %219 = vst [vmem:[#allocation5 + $0x8] sm:$0xff] 0.0
        %220 = vst [vmem:[#allocation5 + $0x10] sm:$0xff] 0.0
        %221 = vst [vmem:[#allocation5 + $0x18] sm:$0xff] 0.0
        %222 = vst [vmem:[#allocation5 + $0x20] sm:$0xff] 0.0
        %223 = vst [vmem:[#allocation5 + $0x28] sm:$0xff] 0.0
        %224 = vst [vmem:[#allocation5 + $0x30] sm:$0xff] 0.0
        %225 = vst [vmem:[#allocation5 + $0x38] sm:$0xff] 0.0
      $region32: #{dice_ce_loss.1} parent=27 // pred_fallthru
        _
      %v226 = vld [vmem:[%s185] sm:$0xff]
      %v227 = vld [vmem:[%s185 + $0x8] sm:$0xff]
      %v228 = vld [vmem:[%s185 + $0x10] sm:$0xff]
      %v229 = vld [vmem:[%s185 + $0x18] sm:$0xff]
      %v230 = vld [vmem:[%s185 + $0x20] sm:$0xff]
      %v231 = vld [vmem:[%s185 + $0x28] sm:$0xff]
      %v232 = vld [vmem:[%s185 + $0x30] sm:$0xff]
      %v233 = vld [vmem:[%s185 + $0x38] sm:$0xff]
      %v234 = vld [vmem:[%s193] sm:$0xff]
      %v235 = vunpack.c.0.s8 %v234
      %v236 = vunpack.c.1.s8 %v234
      %v237 = vunpack.c.2.s8 %v234
      %v238 = vunpack.c.3.s8 %v234
      %vm239 = vcmp.eq.s32.totalorder %v235, 0
      %vm240 = vcmp.eq.s32.totalorder %v236, 0
      %vm241 = vcmp.eq.s32.totalorder %v237, 0
      %vm242 = vcmp.eq.s32.totalorder %v238, 0
      %vm243 = vcmp.eq.s32.totalorder %v235, 1
      %vm244 = vcmp.eq.s32.totalorder %v236, 1
      %vm245 = vcmp.eq.s32.totalorder %v237, 1
      %vm246 = vcmp.eq.s32.totalorder %v238, 1
      %v247 = vsel %vm239, 1, 0
      %v248 = vsel %vm240, 1, 0
      %v249 = vsel %vm241, 1, 0
      %v250 = vsel %vm242, 1, 0
      %v251 = vsel %vm243, 1, 0
      %v252 = vsel %vm244, 1, 0
      %v253 = vsel %vm245, 1, 0
      %v254 = vsel %vm246, 1, 0
      %v255 = vcvt.s32.f32 %v247
      %v256 = vcvt.s32.f32 %v248
      %v257 = vcvt.s32.f32 %v249
      %v258 = vcvt.s32.f32 %v250
      %v259 = vcvt.s32.f32 %v251
      %v260 = vcvt.s32.f32 %v252
      %v261 = vcvt.s32.f32 %v253
      %v262 = vcvt.s32.f32 %v254
      %v263 = vmul.f32 %v226, %v255
      %v264 = vmul.f32 %v227, %v256
      %v265 = vmul.f32 %v228, %v257
      %v266 = vmul.f32 %v229, %v258
      %v267 = vmul.f32 %v230, %v259
      %v268 = vmul.f32 %v231, %v260
      %v269 = vmul.f32 %v232, %v261
      %v270 = vmul.f32 %v233, %v262
      %v271 = vadd.f32 %v263, %v267
      %v272 = vadd.f32 %v264, %v268
      %v273 = vadd.f32 %v265, %v269
      %v274 = vadd.f32 %v266, %v270
      %v275 = vadd.f32 %v255, %v259
      %v276 = vadd.f32 %v256, %v260
      %v277 = vadd.f32 %v257, %v261
      %v278 = vadd.f32 %v258, %v262
      %v279 = vld [vmem:[#allocation2] sm:$0xff]
      %v280 = vld [vmem:[#allocation2 + $0x8] sm:$0xff]
      %v281 = vld [vmem:[#allocation2 + $0x10] sm:$0xff]
      %v282 = vld [vmem:[#allocation2 + $0x18] sm:$0xff]
      %v283 = vadd.f32 %v271, 1e-10
      %v284 = vadd.f32 %v272, 1e-10
      %v285 = vadd.f32 %v273, 1e-10
      %v286 = vadd.f32 %v274, 1e-10
      %v287 = vlog2.pop %v283
      %v288 = vmul.f32 %v287, 0.6931472
      %v289 = vlog2.pop %v284
      %v290 = vmul.f32 %v289, 0.6931472
      %v291 = vlog2.pop %v285
      %v292 = vmul.f32 %v291, 0.6931472
      %v293 = vlog2.pop %v286
      %v294 = vmul.f32 %v293, 0.6931472
      %v295 = vmul.f32 %v275, %v288
      %v296 = vmul.f32 %v276, %v290
      %v297 = vmul.f32 %v277, %v292
      %v298 = vmul.f32 %v278, %v294
      %v299 = vadd.f32 %v279, %v295
      %v300 = vadd.f32 %v280, %v296
      %v301 = vadd.f32 %v281, %v297
      %v302 = vadd.f32 %v282, %v298
      %303 = vst [vmem:[#allocation2] sm:$0xff] %v299
      %304 = vst [vmem:[#allocation2 + $0x8] sm:$0xff] %v300
      %305 = vst [vmem:[#allocation2 + $0x10] sm:$0xff] %v301
      %306 = vst [vmem:[#allocation2 + $0x18] sm:$0xff] %v302
      %v307 = vld [vmem:[#allocation3] sm:$0xff]
      %v308 = vld [vmem:[#allocation3 + $0x8] sm:$0xff]
      %v309 = vld [vmem:[#allocation3 + $0x10] sm:$0xff]
      %v310 = vld [vmem:[#allocation3 + $0x18] sm:$0xff]
      %v311 = vadd.f32 %v307, %v275
      %v312 = vadd.f32 %v308, %v276
      %v313 = vadd.f32 %v309, %v277
      %v314 = vadd.f32 %v310, %v278
      %315 = vst [vmem:[#allocation3] sm:$0xff] %v311
      %316 = vst [vmem:[#allocation3 + $0x8] sm:$0xff] %v312
      %317 = vst [vmem:[#allocation3 + $0x10] sm:$0xff] %v313
      %318 = vst [vmem:[#allocation3 + $0x18] sm:$0xff] %v314
      %v319 = vld [vmem:[#allocation4] sm:$0xff]
      %v320 = vld [vmem:[#allocation4 + $0x8] sm:$0xff]
      %v321 = vld [vmem:[#allocation4 + $0x10] sm:$0xff]
      %v322 = vld [vmem:[#allocation4 + $0x18] sm:$0xff]
      %v323 = vld [vmem:[#allocation4 + $0x20] sm:$0xff]
      %v324 = vld [vmem:[#allocation4 + $0x28] sm:$0xff]
      %v325 = vld [vmem:[#allocation4 + $0x30] sm:$0xff]
      %v326 = vld [vmem:[#allocation4 + $0x38] sm:$0xff]
      %v327 = vadd.f32 %v319, %v263
      %v328 = vadd.f32 %v320, %v264
      %v329 = vadd.f32 %v321, %v265
      %v330 = vadd.f32 %v322, %v266
      %v331 = vadd.f32 %v323, %v267
      %v332 = vadd.f32 %v324, %v268
      %v333 = vadd.f32 %v325, %v269
      %v334 = vadd.f32 %v326, %v270
      %335 = vst [vmem:[#allocation4] sm:$0xff] %v327
      %336 = vst [vmem:[#allocation4 + $0x8] sm:$0xff] %v328
      %337 = vst [vmem:[#allocation4 + $0x10] sm:$0xff] %v329
      %338 = vst [vmem:[#allocation4 + $0x18] sm:$0xff] %v330
      %339 = vst [vmem:[#allocation4 + $0x20] sm:$0xff] %v331
      %340 = vst [vmem:[#allocation4 + $0x28] sm:$0xff] %v332
      %341 = vst [vmem:[#allocation4 + $0x30] sm:$0xff] %v333
      %342 = vst [vmem:[#allocation4 + $0x38] sm:$0xff] %v334
      %v343 = vld [vmem:[#allocation5] sm:$0xff]
      %v344 = vld [vmem:[#allocation5 + $0x8] sm:$0xff]
      %v345 = vld [vmem:[#allocation5 + $0x10] sm:$0xff]
      %v346 = vld [vmem:[#allocation5 + $0x18] sm:$0xff]
      %v347 = vld [vmem:[#allocation5 + $0x20] sm:$0xff]
      %v348 = vld [vmem:[#allocation5 + $0x28] sm:$0xff]
      %v349 = vld [vmem:[#allocation5 + $0x30] sm:$0xff]
      %v350 = vld [vmem:[#allocation5 + $0x38] sm:$0xff]
      %v351 = vadd.f32 %v226, %v255
      %v352 = vadd.f32 %v227, %v256
      %v353 = vadd.f32 %v228, %v257
      %v354 = vadd.f32 %v229, %v258
      %v355 = vadd.f32 %v230, %v259
      %v356 = vadd.f32 %v231, %v260
      %v357 = vadd.f32 %v232, %v261
      %v358 = vadd.f32 %v233, %v262
      %v359 = vadd.f32 %v343, %v351
      %v360 = vadd.f32 %v344, %v352
      %v361 = vadd.f32 %v345, %v353
      %v362 = vadd.f32 %v346, %v354
      %v363 = vadd.f32 %v347, %v355
      %v364 = vadd.f32 %v348, %v356
      %v365 = vadd.f32 %v349, %v357
      %v366 = vadd.f32 %v350, %v358
      %367 = vst [vmem:[#allocation5] sm:$0xff] %v359
      %368 = vst [vmem:[#allocation5 + $0x8] sm:$0xff] %v360
      %369 = vst [vmem:[#allocation5 + $0x10] sm:$0xff] %v361
      %370 = vst [vmem:[#allocation5 + $0x18] sm:$0xff] %v362
      %371 = vst [vmem:[#allocation5 + $0x20] sm:$0xff] %v363
      %372 = vst [vmem:[#allocation5 + $0x28] sm:$0xff] %v364
      %373 = vst [vmem:[#allocation5 + $0x30] sm:$0xff] %v365
      %374 = vst [vmem:[#allocation5 + $0x38] sm:$0xff] %v366
      // Predicated region
      $region33: #{dice_ce_loss.1} parent=27 // pred_check
        %p375 = pneg %p198
      $region34: #{dice_ce_loss.1} parent=27 // pred_check_branch
        %377 = sbr.rel (%p375) target = $region36
      $region35: #{dice_ce_loss.1} parent=27 // pred_region
        %v378 = vlaneseq
        %v379 = vshrl.u32 %v378, 7
        %vm380 = vcmp.eq.s32.totalorder %v379, 0
        %v381 = vld [vmem:[#allocation2] sm:$0xff]
        %v382 = vld [vmem:[#allocation2 + $0x8] sm:$0xff]
        %v383 = vld [vmem:[#allocation2 + $0x10] sm:$0xff]
        %v384 = vld [vmem:[#allocation2 + $0x18] sm:$0xff]
        %v385 = vadd.f32 %v381, %v382
        %v386 = vadd.f32 %v385, %v383
        %v387 = vadd.f32 %v386, %v384
        %388 = vadd.xlane.f32.xlu0 %v387
        %v389 = vpop.xlane.xlu0 %388
        %v390 = vrot.slane %v389, 4
        %v391 = vadd.f32 %v389, %v390
        %v392 = vrot.slane %v391, 2
        %v393 = vadd.f32 %v391, %v392
        %v394 = vrot.slane %v393, 1
        %v395 = vadd.f32 %v393, %v394
        %s396 = vtos %v395
        %v397 = vstv %s396
        %v398 = vsel %vm380, %v397, 0.0
        %vm399 = vcmp.eq.s32.totalorder %v379, 1
        %v400 = vld [vmem:[#allocation3] sm:$0xff]
        %v401 = vld [vmem:[#allocation3 + $0x8] sm:$0xff]
        %v402 = vld [vmem:[#allocation3 + $0x10] sm:$0xff]
        %v403 = vld [vmem:[#allocation3 + $0x18] sm:$0xff]
        %v404 = vadd.f32 %v400, %v401
        %v405 = vadd.f32 %v404, %v402
        %v406 = vadd.f32 %v405, %v403
        %407 = vadd.xlane.f32.xlu0 %v406
        %v408 = vpop.xlane.xlu0 %407
        %v409 = vrot.slane %v408, 4
        %v410 = vadd.f32 %v408, %v409
        %v411 = vrot.slane %v410, 2
        %v412 = vadd.f32 %v410, %v411
        %v413 = vrot.slane %v412, 1
        %v414 = vadd.f32 %v412, %v413
        %s415 = vtos %v414
        %v416 = vstv %s415
        %v417 = vsel %vm399, %v416, %v398
        %vm418 = vcmp.eq.s32.totalorder %v379, 2
        %v419 = vld [vmem:[#allocation4] sm:$0xff]
        %v420 = vld [vmem:[#allocation4 + $0x8] sm:$0xff]
        %v421 = vld [vmem:[#allocation4 + $0x10] sm:$0xff]
        %v422 = vld [vmem:[#allocation4 + $0x18] sm:$0xff]
        %v423 = vadd.f32 %v419, %v420
        %v424 = vadd.f32 %v423, %v421
        %v425 = vadd.f32 %v424, %v422
        %426 = vadd.xlane.f32.xlu0 %v425
        %v427 = vpop.xlane.xlu0 %426
        %v428 = vrot.slane %v427, 4
        %v429 = vadd.f32 %v427, %v428
        %v430 = vrot.slane %v429, 2
        %v431 = vadd.f32 %v429, %v430
        %v432 = vrot.slane %v431, 1
        %v433 = vadd.f32 %v431, %v432
        %s434 = vtos %v433
        %v435 = vstv %s434
        %v436 = vsel %vm418, %v435, %v417
        %vm437 = vcmp.eq.s32.totalorder %v379, 4
        %v438 = vld [vmem:[#allocation5] sm:$0xff]
        %v439 = vld [vmem:[#allocation5 + $0x8] sm:$0xff]
        %v440 = vld [vmem:[#allocation5 + $0x10] sm:$0xff]
        %v441 = vld [vmem:[#allocation5 + $0x18] sm:$0xff]
        %v442 = vadd.f32 %v438, %v439
        %v443 = vadd.f32 %v442, %v440
        %v444 = vadd.f32 %v443, %v441
        %445 = vadd.xlane.f32.xlu0 %v444
        %v446 = vpop.xlane.xlu0 %445
        %v447 = vrot.slane %v446, 4
        %v448 = vadd.f32 %v446, %v447
        %v449 = vrot.slane %v448, 2
        %v450 = vadd.f32 %v448, %v449
        %v451 = vrot.slane %v450, 1
        %v452 = vadd.f32 %v450, %v451
        %s453 = vtos %v452
        %v454 = vstv %s453
        %v455 = vsel %vm437, %v454, %v436
        %vm456 = vcmp.eq.s32.totalorder %v379, 3
        %s457 = scalar_lea.vmem [#allocation4], 32
        %v458 = vld [vmem:[%s457] sm:$0xff]
        %v459 = vld [vmem:[%s457 + $0x8] sm:$0xff]
        %v460 = vld [vmem:[%s457 + $0x10] sm:$0xff]
        %v461 = vld [vmem:[%s457 + $0x18] sm:$0xff]
        %v462 = vadd.f32 %v458, %v459
        %v463 = vadd.f32 %v462, %v460
        %v464 = vadd.f32 %v463, %v461
        %465 = vadd.xlane.f32.xlu0 %v464
        %v466 = vpop.xlane.xlu0 %465
        %v467 = vrot.slane %v466, 4
        %v468 = vadd.f32 %v466, %v467
        %v469 = vrot.slane %v468, 2
        %v470 = vadd.f32 %v468, %v469
        %v471 = vrot.slane %v470, 1
        %v472 = vadd.f32 %v470, %v471
        %s473 = vtos %v472
        %v474 = vstv %s473
        %v475 = vsel %vm456, %v474, %v455
        %vm476 = vcmp.eq.s32.totalorder %v379, 5
        %s477 = scalar_lea.vmem [#allocation5], 32
        %v478 = vld [vmem:[%s477] sm:$0xff]
        %v479 = vld [vmem:[%s477 + $0x8] sm:$0xff]
        %v480 = vld [vmem:[%s477 + $0x10] sm:$0xff]
        %v481 = vld [vmem:[%s477 + $0x18] sm:$0xff]
        %v482 = vadd.f32 %v478, %v479
        %v483 = vadd.f32 %v482, %v480
        %v484 = vadd.f32 %v483, %v481
        %485 = vadd.xlane.f32.xlu0 %v484
        %v486 = vpop.xlane.xlu0 %485
        %v487 = vrot.slane %v486, 4
        %v488 = vadd.f32 %v486, %v487
        %v489 = vrot.slane %v488, 2
        %v490 = vadd.f32 %v488, %v489
        %v491 = vrot.slane %v490, 1
        %v492 = vadd.f32 %v490, %v491
        %s493 = vtos %v492
        %v494 = vstv %s493
        %v495 = vsel %vm476, %v494, %v475
        %496 = vst [vmem:[%s197] sm:$0xff] %v495
      $region36: #{dice_ce_loss.1} parent=27 // pred_fallthru
        _
      %p497 = scmp.lt.s32.totalorder %s17, 1
      %s498 = scalar_select %p497, %s17, 1
      %s499 = smul.addr %s498, 8
      %s500 = scalar_lea.vmem %s2, %s499
      // Predicated region
      $region37: #{dice_ce_loss.1} parent=27 // pred_check
        %p501 = pneg %p99
      $region38: #{dice_ce_loss.1} parent=27 // pred_check_branch
        %503 = sbr.rel (%p501) target = $region40
      $region39: #{dice_ce_loss.1} parent=27 // pred_region
        _
      $region40: #{dice_ce_loss.1} parent=27 // pred_fallthru
        _
    $region28: #{dice_ce_loss.1} parent=5 // pred_fallthru
      _
    %p504 = scmp.le.s32.totalorder 2, %s8
    // Predicated region
    $region41: #{dice_ce_loss.1} parent=5 // pred_check
      %p505 = pneg %p504
    $region42: #{dice_ce_loss.1} parent=5 // pred_check_branch
      %507 = sbr.rel (%p505) target = $region44
    $region43: #{dice_ce_loss.1} parent=5 // pred_region
      %s508 = ssub.s32 %s8, 2
      // Predicated region
      $region45: #{dice_ce_loss.1} parent=43 // pred_check
        %p509 = pneg %p105
      $region46: #{dice_ce_loss.1} parent=43 // pred_check_branch
        %511 = sbr.rel (%p509) target = $region48
      $region47: #{dice_ce_loss.1} parent=43 // pred_region
        %p512 = scmp.lt.s32.totalorder %s19, 1
        %s513 = scalar_select %p512, %s19, 1
        %s514 = smul.addr %s513, 8
        %s515 = scalar_lea.vmem %s2, %s514
      $region48: #{dice_ce_loss.1} parent=43 // pred_fallthru
        _
    $region44: #{dice_ce_loss.1} parent=5 // pred_fallthru
      _
  $region6: #{dice_ce_loss.1} parent=0 // loop_footer
    %s12 = sadd.s32 1, %s8
  $region7: #{dice_ce_loss.1} parent=0 // loop_footer_branch
    %7 = sbr.rel target = $region3
  $region8: #{dice_ce_loss.1} parent=0 // loop_exit
    _

</llo_original>
